<compile_context>
chip_gen: v5e
topology: v5e:2x2
jax: 0.10.0
libtpu: 0.0.40
codegen_flags: <defaults>
</compile_context>

<pallas_src>
import functools

import jax
import jax.numpy as jnp
from jax.experimental import pallas as pl
from jax.experimental.pallas import tpu as pltpu

# ---- model hyper-parameters (small shapes) ----
BATCH = 128
HIDDEN = 32
INPUT_SIZE = 1
OUTPUT_SIZE = 1
GRID_H = 2
GRID_W = 4
SEQ = GRID_H * GRID_W
ROUNDS = 5
N_CELLS = GRID_H * GRID_W

N_WAVES = GRID_H + GRID_W - 1            # 5 anti-diagonals
MAX_WAVE_CELLS = min(GRID_H, GRID_W)     # 2 cells max per wave
MAX_W = MAX_WAVE_CELLS * HIDDEN          # 64 lanes per wave slab
OUT_PACK = 128                           # packed output lane width (>= HIDDEN + 1)


def _wave_cells():
    """Cells of each anti-diagonal, row-major within a wave."""
    waves = []
    for d in range(N_WAVES):
        waves.append([(i, d - i) for i in range(GRID_H) if 0 <= d - i < GRID_W])
    return waves


def _block_rnn_kernel(x_ref, w_in_ref, b_in_ref, w_tr_ref, w_fin_ref, b_fin_ref,
                      out_ref):
    """One lattice pass (final round only) for one batch tile.

    x_ref    : (BT, SEQ)                 final-round input bits
    w_in_ref : (N_WAVES, SEQ, MAX_W)     per-wave packed input weights
    b_in_ref : (N_WAVES, 1, MAX_W)       per-wave fused biases (b_ih+b_seed@Whh+b_hh)
    w_tr_ref : (N_WAVES-1, MAX_W, MAX_W) per-wave fused recurrence (seed folded in)
    w_fin_ref: (MAX_W, OUT_PACK)         [fc_hidden | fc_out | zeros] on slot 0 rows
    b_fin_ref: (1, OUT_PACK)
    out_ref  : (BT, OUT_PACK)            packed [hidden_ext | out-logit | pad]
    """
    x = x_ref[...]                                                  # (BT, SEQ)

    # wave 0: no neighbors, input-only.
    state = jnp.tanh(
        jnp.dot(x, w_in_ref[0], preferred_element_type=jnp.float32)
        + b_in_ref[0])

    # waves 1..N_WAVES-1: one fused matmul+tanh per wave (serial chain).
    # The input matmul depends only on x and overlaps off the critical path.
    for w in range(1, N_WAVES):
        inp = jnp.dot(x, w_in_ref[w], preferred_element_type=jnp.float32) \
              + b_in_ref[w]
        rec = jnp.dot(state, w_tr_ref[w - 1],
                      preferred_element_type=jnp.float32)
        state = jnp.tanh(inp + rec)

    # head: raw packed logits; wrapper applies sigmoid to the single out column.
    out_ref[...] = (jnp.dot(state, w_fin_ref[...],
                            preferred_element_type=jnp.float32)
                    + b_fin_ref[...])


def fuse_params(params):
    """Fold seed Linear into W_hh and pack per-wave weights (runs once)."""
    H = HIDDEN
    wd, bd = params["wd"], params["bd"]          # (NC, 2H, H), (NC, 1, H)
    ws, bs = params["ws"], params["bs"]          # (NC, H, H),  (NC, 1, H)
    wih, bih = params["wih"], params["bih"]      # (NC, 1, H),  (NC, 1, H)
    whh, bhh = params["whh"], params["bhh"]      # (NC, H, H),  (NC, 1, H)

    # (seed @ Wseed + bseed) @ Whh  ==  seed @ (Wseed @ Whh) + bseed @ Whh
    wd_f = jnp.einsum("kph,khq->kpq", wd, whh)            # (NC, 2H, H)
    ws_f = jnp.einsum("kph,khq->kpq", ws, whh)            # (NC, H, H)
    bd_f = jnp.einsum("kih,khq->kiq", bd, whh) + bhh      # (NC, 1, H)
    bs_f = jnp.einsum("kih,khq->kiq", bs, whh) + bhh      # (NC, 1, H)

    waves = _wave_cells()

    w_in = jnp.zeros((N_WAVES, SEQ, MAX_W), jnp.float32)
    b_in = jnp.zeros((N_WAVES, 1, MAX_W), jnp.float32)
    w_tr = jnp.zeros((N_WAVES - 1, MAX_W, MAX_W), jnp.float32)

    for d, cells in enumerate(waves):
        for s, (i, j) in enumerate(cells):
            k = i * GRID_W + j
            c0, c1 = s * H, (s + 1) * H
            # input-bit weight: x bit index == k in the (grid_h, grid_w) reshape
            w_in = w_in.at[d, k, c0:c1].set(wih[k, 0, :])
            # fused additive bias per cell
            if i == 0 and j == 0:
                cb = bih[k, 0] + bhh[k, 0]
            elif i == 0 or j == 0:
                cb = bih[k, 0] + bs_f[k, 0]
            else:
                cb = bih[k, 0] + bd_f[k, 0]
            b_in = b_in.at[d, 0, c0:c1].set(cb)
            # recurrence from previous wave (left / up neighbors live in wave d-1)
            if d > 0:
                prev = waves[d - 1]
                if j > 0:
                    sp = prev.index((i, j - 1))
                    wl = wd_f[k, :H, :] if i > 0 else ws_f[k]
                    w_tr = w_tr.at[d - 1, sp * H:(sp + 1) * H, c0:c1].set(wl)
                if i > 0:
                    sp = prev.index((i - 1, j))
                    wu = wd_f[k, H:, :] if j > 0 else ws_f[k]
                    w_tr = w_tr.at[d - 1, sp * H:(sp + 1) * H, c0:c1].set(wu)

    # head weights: last wave has exactly one cell = (GRID_H-1, GRID_W-1), slot 0
    w_fin = jnp.zeros((MAX_W, OUT_PACK), jnp.float32)
    w_fin = w_fin.at[:H, :H].set(params["wfh"])
    w_fin = w_fin.at[:H, H:H + 1].set(params["wfo"])
    b_fin = jnp.zeros((1, OUT_PACK), jnp.float32)
    b_fin = b_fin.at[:, :H].set(params["bfh"])
    b_fin = b_fin.at[:, H:H + 1].set(params["bfo"])

    return {"w_in": w_in, "b_in": b_in, "w_tr": w_tr,
            "w_fin": w_fin, "b_fin": b_fin}


def default_num_batch_tiles():
    """1 tile on single-TC v5e/v6e; 2 tiles only where 2 TensorCores exist (v7x)."""
    try:
        kind = jax.devices()[0].device_kind.lower()
    except Exception:
        return 1
    return 2 if ("v7" in kind or "tpu7" in kind) else 1


@functools.partial(jax.jit, static_argnames=("rounds", "num_batch_tiles"))
def block_rnn_forward(x, fused, rounds=ROUNDS, num_batch_tiles=1):
    """x: (batch, rounds, seq) float32 -> (out (batch,1), hidden_ext (batch,H))."""
    B = x.shape[0]
    H = HIDDEN

    # Only the final round affects the outputs: the lattice is re-zeroed every
    # round and hidden_ext is never consumed across rounds.
    x_last = x[:, rounds - 1, :].astype(jnp.float32)                # (B, SEQ)

    nb = num_batch_tiles
    assert B % nb == 0
    bt = B // nb

    packed = pl.pallas_call(
        _block_rnn_kernel,
        grid=(nb,),
        in_specs=[
            pl.BlockSpec((bt, SEQ), lambda b: (b, 0)),
            pl.BlockSpec((N_WAVES, SEQ, MAX_W), lambda b: (0, 0, 0)),
            pl.BlockSpec((N_WAVES, 1, MAX_W), lambda b: (0, 0, 0)),
            pl.BlockSpec((N_WAVES - 1, MAX_W, MAX_W), lambda b: (0, 0, 0)),
            pl.BlockSpec((MAX_W, OUT_PACK), lambda b: (0, 0)),
            pl.BlockSpec((1, OUT_PACK), lambda b: (0, 0)),
        ],
        out_specs=pl.BlockSpec((bt, OUT_PACK), lambda b: (b, 0)),
        out_shape=jax.ShapeDtypeStruct((B, OUT_PACK), jnp.float32),
        compiler_params=pltpu.CompilerParams(
            dimension_semantics=("parallel",)),   # batch tiles -> both TCs on v7x
    )(x_last, fused["w_in"], fused["b_in"], fused["w_tr"],
      fused["w_fin"], fused["b_fin"])

    hext = packed[:, :H]                      # un-sigmoided hidden_ext lanes
    out = jax.nn.sigmoid(packed[:, H:H + 1])  # single useful sigmoid column
    return out, hext


def init_params(key):
    """Deterministic parameter init (weights stored transposed: (in, out))."""
    ks = jax.random.split(key, 16)
    s = 0.1
    return {
        "wd":  s * jax.random.normal(ks[0], (N_CELLS, 2 * HIDDEN, HIDDEN), jnp.float32),
        "bd":  s * jax.random.normal(ks[1], (N_CELLS, 1, HIDDEN), jnp.float32),
        "ws":  s * jax.random.normal(ks[2], (N_CELLS, HIDDEN, HIDDEN), jnp.float32),
        "bs":  s * jax.random.normal(ks[3], (N_CELLS, 1, HIDDEN), jnp.float32),
        "wih": s * jax.random.normal(ks[4], (N_CELLS, 1, HIDDEN), jnp.float32),
        "bih": s * jax.random.normal(ks[5], (N_CELLS, 1, HIDDEN), jnp.float32),
        "whh": s * jax.random.normal(ks[6], (N_CELLS, HIDDEN, HIDDEN), jnp.float32),
        "bhh": s * jax.random.normal(ks[7], (N_CELLS, 1, HIDDEN), jnp.float32),
        "wfh": s * jax.random.normal(ks[8], (HIDDEN, HIDDEN), jnp.float32),
        "bfh": s * jax.random.normal(ks[9], (1, HIDDEN), jnp.float32),
        "wfo": s * jax.random.normal(ks[10], (HIDDEN, OUTPUT_SIZE), jnp.float32),
        "bfo": s * jax.random.normal(ks[11], (1, OUTPUT_SIZE), jnp.float32),
    }


def ref_forward(x, params, rounds=ROUNDS):
    """Pure-JAX reference mirroring the PyTorch loop (unfused, for verification)."""
    B = x.shape[0]
    out = hext = None
    for r in range(rounds):
        xb = x[:, r, :]
        grid = [[None for _ in range(GRID_W)] for _ in range(GRID_H)]
        for i in range(GRID_H):
            for j in range(GRID_W):
                k = i * GRID_W + j
                x_bit = xb[:, k:k + 1]
                hl = grid[i][j - 1] if j > 0 else None
                hu = grid[i - 1][j] if i > 0 else None
                if hl is not None and hu is not None:
                    seed = jnp.concatenate([hl, hu], 1) @ params["wd"][k] + params["bd"][k, 0]
                elif hl is not None:
                    seed = hl @ params["ws"][k] + params["bs"][k, 0]
                elif hu is not None:
                    seed = hu @ params["ws"][k] + params["bs"][k, 0]
                else:
                    seed = jnp.zeros((B, HIDDEN), jnp.float32)
                pre = (x_bit * params["wih"][k] + params["bih"][k, 0]
                       + seed @ params["whh"][k] + params["bhh"][k, 0])
                grid[i][j] = jnp.tanh(pre)
        brh = grid[-1][-1]
        hext = brh @ params["wfh"] + params["bfh"][0]
        out = jax.nn.sigmoid(brh @ params["wfo"] + params["bfo"][0])
    return out, hext


if __name__ == "__main__":
    key = jax.random.PRNGKey(0)
    k_p, k_x = jax.random.split(key)
    params = init_params(k_p)
    # input "bits" in {0, 1}, shape (batch, rounds, seq)
    x = jax.random.bernoulli(k_x, 0.5, (BATCH, ROUNDS, SEQ)).astype(jnp.float32)

    fused = fuse_params(params)          # weight folding done once, off the kernel
    nb = default_num_batch_tiles()       # 1 on v5e/v6e (single TC), 2 on v7x

    out, hidden_ext = block_rnn_forward(x, fused, rounds=ROUNDS, num_batch_tiles=nb)
    out, hidden_ext = jax.block_until_ready((out, hidden_ext))

    out_ref, hext_ref = ref_forward(x, params, rounds=ROUNDS)
    assert out.shape == (BATCH, OUTPUT_SIZE) and hidden_ext.shape == (BATCH, HIDDEN)
    assert jnp.allclose(out, out_ref, rtol=1e-5, atol=1e-5)
    assert jnp.allclose(hidden_ext, hext_ref, rtol=1e-5, atol=1e-5)

    print("KERNEL_OK")
</pallas_src>

<mosaic_0001>
module attributes {stable_mosaic.version = 11 : i64} {
  func.func @_block_rnn_kernel(%arg0: i32, %arg1: memref<128x8xf32, #tpu.memory_space<vmem>>, %arg2: memref<5x8x64xf32, #tpu.memory_space<vmem>>, %arg3: memref<5x1x64xf32, #tpu.memory_space<vmem>>, %arg4: memref<4x64x64xf32, #tpu.memory_space<vmem>>, %arg5: memref<64x128xf32, #tpu.memory_space<vmem>>, %arg6: memref<1x128xf32, #tpu.memory_space<vmem>>, %arg7: memref<128x128xf32, #tpu.memory_space<vmem>>) attributes {dimension_semantics = [#tpu.dimension_semantics<parallel>], iteration_bounds = array<i64: 1>, scalar_prefetch = 0 : i64, scratch_operands = 0 : i64, tpu.core_type = #tpu.core_type<tc>, window_params = [{transform_indices = @transform_0, window_bounds = array<i64: 128, 8>}, {pipeline_mode = #tpu.pipeline_mode<synchronous>, transform_indices = @transform_1, window_bounds = array<i64: 5, 8, 64>}, {pipeline_mode = #tpu.pipeline_mode<synchronous>, transform_indices = @transform_2, window_bounds = array<i64: 5, 1, 64>}, {pipeline_mode = #tpu.pipeline_mode<synchronous>, transform_indices = @transform_3, window_bounds = array<i64: 4, 64, 64>}, {pipeline_mode = #tpu.pipeline_mode<synchronous>, transform_indices = @transform_4, window_bounds = array<i64: 64, 128>}, {pipeline_mode = #tpu.pipeline_mode<synchronous>, transform_indices = @transform_5, window_bounds = array<i64: 1, 128>}, {transform_indices = @transform_6, window_bounds = array<i64: 128, 128>}]} {
    %c0 = arith.constant 0 : index
    %c0_0 = arith.constant 0 : index
    %0 = vector.load %arg1[%c0, %c0_0] : memref<128x8xf32, #tpu.memory_space<vmem>>, vector<128x8xf32>
    %c0_1 = arith.constant 0 : index
    %c0_2 = arith.constant 0 : index
    %c0_3 = arith.constant 0 : index
    %1 = vector.load %arg2[%c0_1, %c0_2, %c0_3] : memref<5x8x64xf32, #tpu.memory_space<vmem>>, vector<1x8x64xf32>
    %2 = vector.shape_cast %1 : vector<1x8x64xf32> to vector<8x64xf32>
    %cst = arith.constant dense<0.000000e+00> : vector<128x64xf32>
    %3 = tpu.matmul %0, %2, %cst {dimension_numbers = #tpu.dot_dimension_numbers<[1], [0], [0], [1], [0, 0, 1, 1], [], []>} : vector<128x8xf32>, vector<8x64xf32>, vector<128x64xf32> -> vector<128x64xf32>
    %c0_4 = arith.constant 0 : index
    %c0_5 = arith.constant 0 : index
    %c0_6 = arith.constant 0 : index
    %4 = vector.load %arg3[%c0_4, %c0_5, %c0_6] : memref<5x1x64xf32, #tpu.memory_space<vmem>>, vector<1x1x64xf32>
    %5 = vector.shape_cast %4 : vector<1x1x64xf32> to vector<1x64xf32>
    %6 = vector.broadcast %5 : vector<1x64xf32> to vector<128x64xf32>
    %7 = arith.addf %3, %6 : vector<128x64xf32>
    %8 = math.tanh %7 : vector<128x64xf32>
    %c1 = arith.constant 1 : index
    %c0_7 = arith.constant 0 : index
    %c0_8 = arith.constant 0 : index
    %9 = vector.load %arg2[%c1, %c0_7, %c0_8] : memref<5x8x64xf32, #tpu.memory_space<vmem>>, vector<1x8x64xf32>
    %10 = vector.shape_cast %9 : vector<1x8x64xf32> to vector<8x64xf32>
    %cst_9 = arith.constant dense<0.000000e+00> : vector<128x64xf32>
    %11 = tpu.matmul %0, %10, %cst_9 {dimension_numbers = #tpu.dot_dimension_numbers<[1], [0], [0], [1], [0, 0, 1, 1], [], []>} : vector<128x8xf32>, vector<8x64xf32>, vector<128x64xf32> -> vector<128x64xf32>
    %c1_10 = arith.constant 1 : index
    %c0_11 = arith.constant 0 : index
    %c0_12 = arith.constant 0 : index
    %12 = vector.load %arg3[%c1_10, %c0_11, %c0_12] : memref<5x1x64xf32, #tpu.memory_space<vmem>>, vector<1x1x64xf32>
    %13 = vector.shape_cast %12 : vector<1x1x64xf32> to vector<1x64xf32>
    %14 = vector.broadcast %13 : vector<1x64xf32> to vector<128x64xf32>
    %15 = arith.addf %11, %14 : vector<128x64xf32>
    %c0_13 = arith.constant 0 : index
    %c0_14 = arith.constant 0 : index
    %c0_15 = arith.constant 0 : index
    %16 = vector.load %arg4[%c0_13, %c0_14, %c0_15] : memref<4x64x64xf32, #tpu.memory_space<vmem>>, vector<1x64x64xf32>
    %17 = vector.shape_cast %16 : vector<1x64x64xf32> to vector<64x64xf32>
    %cst_16 = arith.constant dense<0.000000e+00> : vector<128x64xf32>
    %18 = tpu.matmul %8, %17, %cst_16 {dimension_numbers = #tpu.dot_dimension_numbers<[1], [0], [0], [1], [0, 0, 1, 1], [], []>} : vector<128x64xf32>, vector<64x64xf32>, vector<128x64xf32> -> vector<128x64xf32>
    %19 = arith.addf %15, %18 : vector<128x64xf32>
    %20 = math.tanh %19 : vector<128x64xf32>
    %c2 = arith.constant 2 : index
    %c0_17 = arith.constant 0 : index
    %c0_18 = arith.constant 0 : index
    %21 = vector.load %arg2[%c2, %c0_17, %c0_18] : memref<5x8x64xf32, #tpu.memory_space<vmem>>, vector<1x8x64xf32>
    %22 = vector.shape_cast %21 : vector<1x8x64xf32> to vector<8x64xf32>
    %cst_19 = arith.constant dense<0.000000e+00> : vector<128x64xf32>
    %23 = tpu.matmul %0, %22, %cst_19 {dimension_numbers = #tpu.dot_dimension_numbers<[1], [0], [0], [1], [0, 0, 1, 1], [], []>} : vector<128x8xf32>, vector<8x64xf32>, vector<128x64xf32> -> vector<128x64xf32>
    %c2_20 = arith.constant 2 : index
    %c0_21 = arith.constant 0 : index
    %c0_22 = arith.constant 0 : index
    %24 = vector.load %arg3[%c2_20, %c0_21, %c0_22] : memref<5x1x64xf32, #tpu.memory_space<vmem>>, vector<1x1x64xf32>
    %25 = vector.shape_cast %24 : vector<1x1x64xf32> to vector<1x64xf32>
    %26 = vector.broadcast %25 : vector<1x64xf32> to vector<128x64xf32>
    %27 = arith.addf %23, %26 : vector<128x64xf32>
    %c1_23 = arith.constant 1 : index
    %c0_24 = arith.constant 0 : index
    %c0_25 = arith.constant 0 : index
    %28 = vector.load %arg4[%c1_23, %c0_24, %c0_25] : memref<4x64x64xf32, #tpu.memory_space<vmem>>, vector<1x64x64xf32>
    %29 = vector.shape_cast %28 : vector<1x64x64xf32> to vector<64x64xf32>
    %cst_26 = arith.constant dense<0.000000e+00> : vector<128x64xf32>
    %30 = tpu.matmul %20, %29, %cst_26 {dimension_numbers = #tpu.dot_dimension_numbers<[1], [0], [0], [1], [0, 0, 1, 1], [], []>} : vector<128x64xf32>, vector<64x64xf32>, vector<128x64xf32> -> vector<128x64xf32>
    %31 = arith.addf %27, %30 : vector<128x64xf32>
    %32 = math.tanh %31 : vector<128x64xf32>
    %c3 = arith.constant 3 : index
    %c0_27 = arith.constant 0 : index
    %c0_28 = arith.constant 0 : index
    %33 = vector.load %arg2[%c3, %c0_27, %c0_28] : memref<5x8x64xf32, #tpu.memory_space<vmem>>, vector<1x8x64xf32>
    %34 = vector.shape_cast %33 : vector<1x8x64xf32> to vector<8x64xf32>
    %cst_29 = arith.constant dense<0.000000e+00> : vector<128x64xf32>
    %35 = tpu.matmul %0, %34, %cst_29 {dimension_numbers = #tpu.dot_dimension_numbers<[1], [0], [0], [1], [0, 0, 1, 1], [], []>} : vector<128x8xf32>, vector<8x64xf32>, vector<128x64xf32> -> vector<128x64xf32>
    %c3_30 = arith.constant 3 : index
    %c0_31 = arith.constant 0 : index
    %c0_32 = arith.constant 0 : index
    %36 = vector.load %arg3[%c3_30, %c0_31, %c0_32] : memref<5x1x64xf32, #tpu.memory_space<vmem>>, vector<1x1x64xf32>
    %37 = vector.shape_cast %36 : vector<1x1x64xf32> to vector<1x64xf32>
    %38 = vector.broadcast %37 : vector<1x64xf32> to vector<128x64xf32>
    %39 = arith.addf %35, %38 : vector<128x64xf32>
    %c2_33 = arith.constant 2 : index
    %c0_34 = arith.constant 0 : index
    %c0_35 = arith.constant 0 : index
    %40 = vector.load %arg4[%c2_33, %c0_34, %c0_35] : memref<4x64x64xf32, #tpu.memory_space<vmem>>, vector<1x64x64xf32>
    %41 = vector.shape_cast %40 : vector<1x64x64xf32> to vector<64x64xf32>
    %cst_36 = arith.constant dense<0.000000e+00> : vector<128x64xf32>
    %42 = tpu.matmul %32, %41, %cst_36 {dimension_numbers = #tpu.dot_dimension_numbers<[1], [0], [0], [1], [0, 0, 1, 1], [], []>} : vector<128x64xf32>, vector<64x64xf32>, vector<128x64xf32> -> vector<128x64xf32>
    %43 = arith.addf %39, %42 : vector<128x64xf32>
    %44 = math.tanh %43 : vector<128x64xf32>
    %c4 = arith.constant 4 : index
    %c0_37 = arith.constant 0 : index
    %c0_38 = arith.constant 0 : index
    %45 = vector.load %arg2[%c4, %c0_37, %c0_38] : memref<5x8x64xf32, #tpu.memory_space<vmem>>, vector<1x8x64xf32>
    %46 = vector.shape_cast %45 : vector<1x8x64xf32> to vector<8x64xf32>
    %cst_39 = arith.constant dense<0.000000e+00> : vector<128x64xf32>
    %47 = tpu.matmul %0, %46, %cst_39 {dimension_numbers = #tpu.dot_dimension_numbers<[1], [0], [0], [1], [0, 0, 1, 1], [], []>} : vector<128x8xf32>, vector<8x64xf32>, vector<128x64xf32> -> vector<128x64xf32>
    %c4_40 = arith.constant 4 : index
    %c0_41 = arith.constant 0 : index
    %c0_42 = arith.constant 0 : index
    %48 = vector.load %arg3[%c4_40, %c0_41, %c0_42] : memref<5x1x64xf32, #tpu.memory_space<vmem>>, vector<1x1x64xf32>
    %49 = vector.shape_cast %48 : vector<1x1x64xf32> to vector<1x64xf32>
    %50 = vector.broadcast %49 : vector<1x64xf32> to vector<128x64xf32>
    %51 = arith.addf %47, %50 : vector<128x64xf32>
    %c3_43 = arith.constant 3 : index
    %c0_44 = arith.constant 0 : index
    %c0_45 = arith.constant 0 : index
    %52 = vector.load %arg4[%c3_43, %c0_44, %c0_45] : memref<4x64x64xf32, #tpu.memory_space<vmem>>, vector<1x64x64xf32>
    %53 = vector.shape_cast %52 : vector<1x64x64xf32> to vector<64x64xf32>
    %cst_46 = arith.constant dense<0.000000e+00> : vector<128x64xf32>
    %54 = tpu.matmul %44, %53, %cst_46 {dimension_numbers = #tpu.dot_dimension_numbers<[1], [0], [0], [1], [0, 0, 1, 1], [], []>} : vector<128x64xf32>, vector<64x64xf32>, vector<128x64xf32> -> vector<128x64xf32>
    %55 = arith.addf %51, %54 : vector<128x64xf32>
    %56 = math.tanh %55 : vector<128x64xf32>
    %c0_47 = arith.constant 0 : index
    %c0_48 = arith.constant 0 : index
    %57 = vector.load %arg5[%c0_47, %c0_48] : memref<64x128xf32, #tpu.memory_space<vmem>>, vector<64x128xf32>
    %cst_49 = arith.constant dense<0.000000e+00> : vector<128x128xf32>
    %58 = tpu.matmul %56, %57, %cst_49 {dimension_numbers = #tpu.dot_dimension_numbers<[1], [0], [0], [1], [0, 0, 1, 1], [], []>} : vector<128x64xf32>, vector<64x128xf32>, vector<128x128xf32> -> vector<128x128xf32>
    %c0_50 = arith.constant 0 : index
    %c0_51 = arith.constant 0 : index
    %59 = vector.load %arg6[%c0_50, %c0_51] : memref<1x128xf32, #tpu.memory_space<vmem>>, vector<1x128xf32>
    %60 = vector.broadcast %59 : vector<1x128xf32> to vector<128x128xf32>
    %61 = arith.addf %58, %60 : vector<128x128xf32>
    %c0_52 = arith.constant 0 : index
    %c0_53 = arith.constant 0 : index
    %62 = vector.load %arg7[%c0_52, %c0_53] : memref<128x128xf32, #tpu.memory_space<vmem>>, vector<128x128xf32>
    tpu.vector_store %arg7[%c0_52, %c0_53], %61 {strides = array<i32>} : memref<128x128xf32, #tpu.memory_space<vmem>>, vector<128x128xf32>,
    return
  }
  func.func @transform_0(%arg0: i32) -> (i32, i32) {
    %c0_i32 = arith.constant 0 : i32
    %c0_i32_0 = arith.constant 0 : i32
    return %arg0, %c0_i32 : i32, i32
  }
  func.func @transform_1(%arg0: i32) -> (i32, i32, i32) {
    %c0_i32 = arith.constant 0 : i32
    %c0_i32_0 = arith.constant 0 : i32
    %c0_i32_1 = arith.constant 0 : i32
    %c0_i32_2 = arith.constant 0 : i32
    return %c0_i32, %c0_i32_0, %c0_i32_1 : i32, i32, i32
  }
  func.func @transform_2(%arg0: i32) -> (i32, i32, i32) {
    %c0_i32 = arith.constant 0 : i32
    %c0_i32_0 = arith.constant 0 : i32
    %c0_i32_1 = arith.constant 0 : i32
    %c0_i32_2 = arith.constant 0 : i32
    return %c0_i32, %c0_i32_0, %c0_i32_1 : i32, i32, i32
  }
  func.func @transform_3(%arg0: i32) -> (i32, i32, i32) {
    %c0_i32 = arith.constant 0 : i32
    %c0_i32_0 = arith.constant 0 : i32
    %c0_i32_1 = arith.constant 0 : i32
    %c0_i32_2 = arith.constant 0 : i32
    return %c0_i32, %c0_i32_0, %c0_i32_1 : i32, i32, i32
  }
  func.func @transform_4(%arg0: i32) -> (i32, i32) {
    %c0_i32 = arith.constant 0 : i32
    %c0_i32_0 = arith.constant 0 : i32
    %c0_i32_1 = arith.constant 0 : i32
    return %c0_i32, %c0_i32_0 : i32, i32
  }
  func.func @transform_5(%arg0: i32) -> (i32, i32) {
    %c0_i32 = arith.constant 0 : i32
    %c0_i32_0 = arith.constant 0 : i32
    %c0_i32_1 = arith.constant 0 : i32
    return %c0_i32, %c0_i32_0 : i32, i32
  }
  func.func @transform_6(%arg0: i32) -> (i32, i32) {
    %c0_i32 = arith.constant 0 : i32
    %c0_i32_0 = arith.constant 0 : i32
    return %arg0, %c0_i32 : i32, i32
  }
}

</mosaic_0001>

<llo_original>
// kernel: block_rnn_forward.1
$region0: #{block_rnn_forward.1}
  #allocation0 [shape = 'u32[]', space=smem, size = 0x4, offset = 0x4, fixed_abs, tag = 'smem constant byte address 0x4 - core index']
  #allocation1 [shape = 'u32[72,128]{1,0:T(1,128)}', space=vmem, size = 0x9000, scoped, tag = 'internal scratch']
  %s0 = inlined_call_operand.vmem [shape: f32[128,8], index: 0, kind: input, shape index: {}]
  %s1 = inlined_call_operand.vmem [shape: f32[5,8,64], index: 1, kind: input, shape index: {}]
  %s2 = inlined_call_operand.vmem [shape: f32[5,1,64], index: 2, kind: input, shape index: {}]
  %s3 = inlined_call_operand.hbm [shape: f32[4,64,64], index: 3, kind: input, shape index: {}]
  %s4 = inlined_call_operand.vmem [shape: f32[64,128], index: 4, kind: input, shape index: {}]
  %s5 = inlined_call_operand.vmem [shape: f32[1,128], index: 5, kind: input, shape index: {}]
  %s6 = inlined_call_operand.vmem [shape: f32[128,128], index: 6, kind: output, shape index: {}]
  %s7 = sld [smem:[#allocation0]]
  $region38: #{block_rnn_forward.1} parent=0
    _
  %s9 = ssub.s32 1, %s7
  %s10 = scalar_select 0, %s9, %s7
  $region1: #{block_rnn_forward.1} parent=0
    #allocation2 [shape = 'u8[131072]{0}', space=vmem, size = 0x20000, scoped, tag = 'input window, operand 3, single buffered']
    #allocation3 [shape = 's32[1]{0}', space=sflag, size = 0x4, scoped, tag = 'scoped memory for block_rnn_forward.1']
    %11 = vsyncpa [#allocation3], 0
    // Predicated region
    $region2: #{block_rnn_forward.1} parent=1 // pred_check
      _
    $region3: #{block_rnn_forward.1} parent=1 // pred_check_branch
      %13 = sbr.rel (0) target = $region5
    $region4: #{block_rnn_forward.1} parent=1 // pred_region
      _
    $region5: #{block_rnn_forward.1} parent=1 // pred_fallthru
      _
    // Predicated region
    $region6: #{block_rnn_forward.1} parent=1 // pred_check
      _
    $region7: #{block_rnn_forward.1} parent=1 // pred_check_branch
      %15 = sbr.rel (0) target = $region9
    $region8: #{block_rnn_forward.1} parent=1 // pred_region
      _
    $region9: #{block_rnn_forward.1} parent=1 // pred_fallthru
      _
    // Predicated region
    $region10: #{block_rnn_forward.1} parent=1 // pred_check
      _
    $region11: #{block_rnn_forward.1} parent=1 // pred_check_branch
      %17 = sbr.rel (0) target = $region13
    $region12: #{block_rnn_forward.1} parent=1 // pred_region
      _
    $region13: #{block_rnn_forward.1} parent=1 // pred_fallthru
      _
    // Predicated region
    $region14: #{block_rnn_forward.1} parent=1 // pred_check
      _
    $region15: #{block_rnn_forward.1} parent=1 // pred_check_branch
      %19 = sbr.rel (0) target = $region17
    $region16: #{block_rnn_forward.1} parent=1 // pred_region
      %21 = vsyncadd [#allocation3], 0
      %s22 = sshll.u32 %s3, 4
      %s23 = int_to_ptr.hbm [resolvable:$true] %s22
      %s24 = sshll.u32 [#allocation2], 4
      %s25 = int_to_ptr.vmem [resolvable:$true] %s24
      %30 = dma.hbm_to_vmem [thread:$0]  %s23, 4096, %s25, [#allocation3], 128, 128, 8
    $region17: #{block_rnn_forward.1} parent=1 // pred_fallthru
      _
    // Predicated region
    $region18: #{block_rnn_forward.1} parent=1 // pred_check
      _
    $region19: #{block_rnn_forward.1} parent=1 // pred_check_branch
      %32 = sbr.rel (0) target = $region21
    $region20: #{block_rnn_forward.1} parent=1 // pred_region
      _
    $region21: #{block_rnn_forward.1} parent=1 // pred_fallthru
      _
    // Predicated region
    $region22: #{block_rnn_forward.1} parent=1 // pred_check
      _
    $region23: #{block_rnn_forward.1} parent=1 // pred_check_branch
      %34 = sbr.rel (0) target = $region25
    $region24: #{block_rnn_forward.1} parent=1 // pred_region
      _
    $region25: #{block_rnn_forward.1} parent=1 // pred_fallthru
      _
    // Predicated region
    $region26: #{block_rnn_forward.1} parent=1 // pred_check
      _
    $region27: #{block_rnn_forward.1} parent=1 // pred_check_branch
      %36 = sbr.rel (0) target = $region29
    $region28: #{block_rnn_forward.1} parent=1 // pred_region
      %38 = dma.done [#allocation3], 4096
    $region29: #{block_rnn_forward.1} parent=1 // pred_fallthru
      _
    %v39 = vld [vmem:[%s0] sm:$0xff]
    %v40 = vld [vmem:[%s0 + $0x8] sm:$0xff]
    %v41 = vld [vmem:[%s0 + $0x10] sm:$0xff]
    %v42 = vld [vmem:[%s0 + $0x18] sm:$0xff]
    %v43 = vld [vmem:[%s0 + $0x20] sm:$0xff]
    %v44 = vld [vmem:[%s0 + $0x28] sm:$0xff]
    %v45 = vld [vmem:[%s0 + $0x30] sm:$0xff]
    %v46 = vld [vmem:[%s0 + $0x38] sm:$0xff]
    %v47 = vld [vmem:[%s0 + $0x40] sm:$0xff]
    %v48 = vld [vmem:[%s0 + $0x48] sm:$0xff]
    %v49 = vld [vmem:[%s0 + $0x50] sm:$0xff]
    %v50 = vld [vmem:[%s0 + $0x58] sm:$0xff]
    %v51 = vld [vmem:[%s0 + $0x60] sm:$0xff]
    %v52 = vld [vmem:[%s0 + $0x68] sm:$0xff]
    %v53 = vld [vmem:[%s0 + $0x70] sm:$0xff]
    %v54 = vld [vmem:[%s0 + $0x78] sm:$0xff]
    %v55 = vld [vmem:[%s1] sm:$0xff]
    %v56 = vld [vmem:[%s2] sm:$0x1]
    %v58 = vperm.slane %v56, 0
    %vm60 = vcmask 64512
    %v62 = vsel %vm60, %v39, 0
    %v65 = vsel %vm60, %v40, 0
    %v68 = vsel %vm60, %v41, 0
    %v71 = vsel %vm60, %v42, 0
    %v74 = vsel %vm60, %v43, 0
    %v77 = vsel %vm60, %v44, 0
    %v80 = vsel %vm60, %v45, 0
    %v83 = vsel %vm60, %v46, 0
    %v86 = vsel %vm60, %v47, 0
    %v89 = vsel %vm60, %v48, 0
    %v92 = vsel %vm60, %v49, 0
    %v95 = vsel %vm60, %v50, 0
    %v98 = vsel %vm60, %v51, 0
    %v101 = vsel %vm60, %v52, 0
    %v104 = vsel %vm60, %v53, 0
    %v107 = vsel %vm60, %v54, 0
    %109 = vmatpush.msra.mxu0 0.0
    %110 = vmatpush.msra.mxu0 0.0
    %111 = vmatpush.msra.mxu0 0.0
    %112 = vmatpush.msra.mxu0 0.0
    %113 = vmatpush.msra.mxu0 0.0
    %114 = vmatpush.msra.mxu0 0.0
    %115 = vmatpush.msra.mxu0 0.0
    %116 = vmatpush.msra.mxu0 0.0
    %117 = vmatpush.msra.mxu0 0.0
    %118 = vmatpush.msra.mxu0 0.0
    %119 = vmatpush.msra.mxu0 0.0
    %120 = vmatpush.msra.mxu0 0.0
    %121 = vmatpush.msra.mxu0 0.0
    %122 = vmatpush.msra.mxu0 0.0
    %123 = vmatpush.msra.mxu0 0.0
    %124 = vmatpush.msra.mxu0 %v55
    %125 = vmatmul.f32.gmra.mxu0 %v62
    %v126 = vpop.f32.mrf.mxu0
    %v127 = vadd.f32 %v58, %v126
    %128 = vmatmul.f32.gmra.mxu0 %v65
    %v129 = vpop.f32.mrf.mxu0
    %v130 = vadd.f32 %v58, %v129
    %131 = vmatmul.f32.gmra.mxu0 %v68
    %v132 = vpop.f32.mrf.mxu0
    %v133 = vadd.f32 %v58, %v132
    %134 = vmatmul.f32.gmra.mxu0 %v71
    %v135 = vpop.f32.mrf.mxu0
    %v136 = vadd.f32 %v58, %v135
    %137 = vmatmul.f32.gmra.mxu0 %v74
    %v138 = vpop.f32.mrf.mxu0
    %v139 = vadd.f32 %v58, %v138
    %140 = vmatmul.f32.gmra.mxu0 %v77
    %v141 = vpop.f32.mrf.mxu0
    %v142 = vadd.f32 %v58, %v141
    %143 = vmatmul.f32.gmra.mxu0 %v80
    %v144 = vpop.f32.mrf.mxu0
    %v145 = vadd.f32 %v58, %v144
    %146 = vmatmul.f32.gmra.mxu0 %v83
    %v147 = vpop.f32.mrf.mxu0
    %v148 = vadd.f32 %v58, %v147
    %149 = vmatmul.f32.gmra.mxu0 %v86
    %v150 = vpop.f32.mrf.mxu0
    %v151 = vadd.f32 %v58, %v150
    %152 = vmatmul.f32.gmra.mxu0 %v89
    %v153 = vpop.f32.mrf.mxu0
    %v154 = vadd.f32 %v58, %v153
    %155 = vmatmul.f32.gmra.mxu0 %v92
    %v156 = vpop.f32.mrf.mxu0
    %v157 = vadd.f32 %v58, %v156
    %158 = vmatmul.f32.gmra.mxu0 %v95
    %v159 = vpop.f32.mrf.mxu0
    %v160 = vadd.f32 %v58, %v159
    %161 = vmatmul.f32.gmra.mxu0 %v98
    %v162 = vpop.f32.mrf.mxu0
    %v163 = vadd.f32 %v58, %v162
    %164 = vmatmul.f32.gmra.mxu0 %v101
    %v165 = vpop.f32.mrf.mxu0
    %v166 = vadd.f32 %v58, %v165
    %167 = vmatmul.f32.gmra.mxu0 %v104
    %v168 = vpop.f32.mrf.mxu0
    %v169 = vadd.f32 %v58, %v168
    %170 = vmatmul.f32.gmra.mxu0 %v107
    %v171 = vpop.f32.mrf.mxu0
    %v172 = vadd.f32 %v58, %v171
    %173 = vdwg.mxu0
    %v174 = vtanh.pop %v127
    %v175 = vtanh.pop %v130
    %v176 = vtanh.pop %v133
    %v177 = vtanh.pop %v136
    %v178 = vtanh.pop %v139
    %v179 = vtanh.pop %v142
    %v180 = vtanh.pop %v145
    %v181 = vtanh.pop %v148
    %v182 = vtanh.pop %v151
    %v183 = vtanh.pop %v154
    %v184 = vtanh.pop %v157
    %v185 = vtanh.pop %v160
    %v186 = vtanh.pop %v163
    %v187 = vtanh.pop %v166
    %v188 = vtanh.pop %v169
    %v189 = vtanh.pop %v172
    %s190 = scalar_lea.vmem %s1, 8
    %v191 = vld [vmem:[%s190] sm:$0xff]
    %s192 = scalar_lea.vmem %s2, 1
    %v193 = vld [vmem:[%s192] sm:$0x1]
    %v195 = vperm.slane %v193, 0
    %197 = vmatpush.msra.mxu0 0.0
    %198 = vmatpush.msra.mxu0 0.0
    %199 = vmatpush.msra.mxu0 0.0
    %200 = vmatpush.msra.mxu0 0.0
    %201 = vmatpush.msra.mxu0 0.0
    %202 = vmatpush.msra.mxu0 0.0
    %203 = vmatpush.msra.mxu0 0.0
    %204 = vmatpush.msra.mxu0 0.0
    %205 = vmatpush.msra.mxu0 0.0
    %206 = vmatpush.msra.mxu0 0.0
    %207 = vmatpush.msra.mxu0 0.0
    %208 = vmatpush.msra.mxu0 0.0
    %209 = vmatpush.msra.mxu0 0.0
    %210 = vmatpush.msra.mxu0 0.0
    %211 = vmatpush.msra.mxu0 0.0
    %212 = vmatpush.msra.mxu0 %v191
    %213 = vmatmul.f32.gmra.mxu0 %v62
    %v214 = vpop.f32.mrf.mxu0
    %v215 = vadd.f32 %v195, %v214
    %216 = vmatmul.f32.gmra.mxu0 %v65
    %v217 = vpop.f32.mrf.mxu0
    %v218 = vadd.f32 %v195, %v217
    %219 = vmatmul.f32.gmra.mxu0 %v68
    %v220 = vpop.f32.mrf.mxu0
    %v221 = vadd.f32 %v195, %v220
    %222 = vmatmul.f32.gmra.mxu0 %v71
    %v223 = vpop.f32.mrf.mxu0
    %v224 = vadd.f32 %v195, %v223
    %225 = vmatmul.f32.gmra.mxu0 %v74
    %v226 = vpop.f32.mrf.mxu0
    %v227 = vadd.f32 %v195, %v226
    %228 = vmatmul.f32.gmra.mxu0 %v77
    %v229 = vpop.f32.mrf.mxu0
    %v230 = vadd.f32 %v195, %v229
    %231 = vmatmul.f32.gmra.mxu0 %v80
    %v232 = vpop.f32.mrf.mxu0
    %v233 = vadd.f32 %v195, %v232
    %234 = vmatmul.f32.gmra.mxu0 %v83
    %v235 = vpop.f32.mrf.mxu0
    %v236 = vadd.f32 %v195, %v235
    %237 = vmatmul.f32.gmra.mxu0 %v86
    %v238 = vpop.f32.mrf.mxu0
    %v239 = vadd.f32 %v195, %v238
    %240 = vmatmul.f32.gmra.mxu0 %v89
    %v241 = vpop.f32.mrf.mxu0
    %v242 = vadd.f32 %v195, %v241
    %243 = vmatmul.f32.gmra.mxu0 %v92
    %v244 = vpop.f32.mrf.mxu0
    %v245 = vadd.f32 %v195, %v244
    %246 = vmatmul.f32.gmra.mxu0 %v95
    %v247 = vpop.f32.mrf.mxu0
    %v248 = vadd.f32 %v195, %v247
    %249 = vmatmul.f32.gmra.mxu0 %v98
    %v250 = vpop.f32.mrf.mxu0
    %v251 = vadd.f32 %v195, %v250
    %252 = vmatmul.f32.gmra.mxu0 %v101
    %v253 = vpop.f32.mrf.mxu0
    %v254 = vadd.f32 %v195, %v253
    %255 = vmatmul.f32.gmra.mxu0 %v104
    %v256 = vpop.f32.mrf.mxu0
    %v257 = vadd.f32 %v195, %v256
    %258 = vmatmul.f32.gmra.mxu0 %v107
    %v259 = vpop.f32.mrf.mxu0
    %v260 = vadd.f32 %v195, %v259
    %261 = vdwg.mxu0
    %v262 = vld [vmem:[#allocation2] sm:$0xff]
    %v263 = vld [vmem:[#allocation2 + $0x8] sm:$0xff]
    %v264 = vld [vmem:[#allocation2 + $0x10] sm:$0xff]
    %v265 = vld [vmem:[#allocation2 + $0x18] sm:$0xff]
    %v266 = vld [vmem:[#allocation2 + $0x20] sm:$0xff]
    %v267 = vld [vmem:[#allocation2 + $0x28] sm:$0xff]
    %v268 = vld [vmem:[#allocation2 + $0x30] sm:$0xff]
    %v269 = vld [vmem:[#allocation2 + $0x38] sm:$0xff]
    %vm270 = vcmask 523264
    %v272 = vsel %vm270, %v174, 0
    %v275 = vsel %vm270, %v175, 0
    %v278 = vsel %vm270, %v176, 0
    %v281 = vsel %vm270, %v177, 0
    %v284 = vsel %vm270, %v178, 0
    %v287 = vsel %vm270, %v179, 0
    %v290 = vsel %vm270, %v180, 0
    %v293 = vsel %vm270, %v181, 0
    %v296 = vsel %vm270, %v182, 0
    %v299 = vsel %vm270, %v183, 0
    %v302 = vsel %vm270, %v184, 0
    %v305 = vsel %vm270, %v185, 0
    %v308 = vsel %vm270, %v186, 0
    %v311 = vsel %vm270, %v187, 0
    %v314 = vsel %vm270, %v188, 0
    %v317 = vsel %vm270, %v189, 0
    %319 = vmatpush.msra.mxu0 0.0
    %320 = vmatpush.msra.mxu0 0.0
    %321 = vmatpush.msra.mxu0 0.0
    %322 = vmatpush.msra.mxu0 0.0
    %323 = vmatpush.msra.mxu0 0.0
    %324 = vmatpush.msra.mxu0 0.0
    %325 = vmatpush.msra.mxu0 0.0
    %326 = vmatpush.msra.mxu0 0.0
    %327 = vmatpush.msra.mxu0 %v269
    %328 = vmatpush.msra.mxu0 %v268
    %329 = vmatpush.msra.mxu0 %v267
    %330 = vmatpush.msra.mxu0 %v266
    %331 = vmatpush.msra.mxu0 %v265
    %332 = vmatpush.msra.mxu0 %v264
    %333 = vmatpush.msra.mxu0 %v263
    %334 = vmatpush.msra.mxu0 %v262
    %335 = vmatmul.f32.gmra.mxu0 %v272
    %v336 = vpop.f32.mrf.mxu0
    %v337 = vadd.f32 0.0, %v336
    %338 = vmatmul.f32.gmra.mxu0 %v275
    %v339 = vpop.f32.mrf.mxu0
    %v340 = vadd.f32 0.0, %v339
    %341 = vmatmul.f32.gmra.mxu0 %v278
    %v342 = vpop.f32.mrf.mxu0
    %v343 = vadd.f32 0.0, %v342
    %344 = vmatmul.f32.gmra.mxu0 %v281
    %v345 = vpop.f32.mrf.mxu0
    %v346 = vadd.f32 0.0, %v345
    %347 = vmatmul.f32.gmra.mxu0 %v284
    %v348 = vpop.f32.mrf.mxu0
    %v349 = vadd.f32 0.0, %v348
    %350 = vmatmul.f32.gmra.mxu0 %v287
    %v351 = vpop.f32.mrf.mxu0
    %v352 = vadd.f32 0.0, %v351
    %353 = vmatmul.f32.gmra.mxu0 %v290
    %v354 = vpop.f32.mrf.mxu0
    %v355 = vadd.f32 0.0, %v354
    %356 = vmatmul.f32.gmra.mxu0 %v293
    %v357 = vpop.f32.mrf.mxu0
    %v358 = vadd.f32 0.0, %v357
    %359 = vmatmul.f32.gmra.mxu0 %v296
    %v360 = vpop.f32.mrf.mxu0
    %v361 = vadd.f32 0.0, %v360
    %362 = vmatmul.f32.gmra.mxu0 %v299
    %v363 = vpop.f32.mrf.mxu0
    %v364 = vadd.f32 0.0, %v363
    %365 = vmatmul.f32.gmra.mxu0 %v302
    %v366 = vpop.f32.mrf.mxu0
    %v367 = vadd.f32 0.0, %v366
    %368 = vmatmul.f32.gmra.mxu0 %v305
    %v369 = vpop.f32.mrf.mxu0
    %v370 = vadd.f32 0.0, %v369
    %371 = vmatmul.f32.gmra.mxu0 %v308
    %v372 = vpop.f32.mrf.mxu0
    %v373 = vadd.f32 0.0, %v372
    %374 = vmatmul.f32.gmra.mxu0 %v311
    %v375 = vpop.f32.mrf.mxu0
    %v376 = vadd.f32 0.0, %v375
    %377 = vmatmul.f32.gmra.mxu0 %v314
    %v378 = vpop.f32.mrf.mxu0
    %v379 = vadd.f32 0.0, %v378
    %380 = vmatmul.f32.gmra.mxu0 %v317
    %v381 = vpop.f32.mrf.mxu0
    %v382 = vadd.f32 0.0, %v381
    %383 = vdwg.mxu0
    %v384 = vadd.f32 %v215, %v337
    %v385 = vadd.f32 %v218, %v340
    %v386 = vadd.f32 %v221, %v343
    %v387 = vadd.f32 %v224, %v346
    %v388 = vadd.f32 %v227, %v349
    %v389 = vadd.f32 %v230, %v352
    %v390 = vadd.f32 %v233, %v355
    %v391 = vadd.f32 %v236, %v358
    %v392 = vadd.f32 %v239, %v361
    %v393 = vadd.f32 %v242, %v364
    %v394 = vadd.f32 %v245, %v367
    %v395 = vadd.f32 %v248, %v370
    %v396 = vadd.f32 %v251, %v373
    %v397 = vadd.f32 %v254, %v376
    %v398 = vadd.f32 %v257, %v379
    %v399 = vadd.f32 %v260, %v382
    %v400 = vtanh.pop %v384
    %v401 = vtanh.pop %v385
    %v402 = vtanh.pop %v386
    %v403 = vtanh.pop %v387
    %v404 = vtanh.pop %v388
    %v405 = vtanh.pop %v389
    %v406 = vtanh.pop %v390
    %v407 = vtanh.pop %v391
    %v408 = vtanh.pop %v392
    %v409 = vtanh.pop %v393
    %v410 = vtanh.pop %v394
    %v411 = vtanh.pop %v395
    %v412 = vtanh.pop %v396
    %v413 = vtanh.pop %v397
    %v414 = vtanh.pop %v398
    %v415 = vtanh.pop %v399
    %s416 = scalar_lea.vmem %s1, 16
    %v417 = vld [vmem:[%s416] sm:$0xff]
    %s418 = scalar_lea.vmem %s2, 2
    %v419 = vld [vmem:[%s418] sm:$0x1]
    %v421 = vperm.slane %v419, 0
    %423 = vmatpush.msra.mxu0 0.0
    %424 = vmatpush.msra.mxu0 0.0
    %425 = vmatpush.msra.mxu0 0.0
    %426 = vmatpush.msra.mxu0 0.0
    %427 = vmatpush.msra.mxu0 0.0
    %428 = vmatpush.msra.mxu0 0.0
    %429 = vmatpush.msra.mxu0 0.0
    %430 = vmatpush.msra.mxu0 0.0
    %431 = vmatpush.msra.mxu0 0.0
    %432 = vmatpush.msra.mxu0 0.0
    %433 = vmatpush.msra.mxu0 0.0
    %434 = vmatpush.msra.mxu0 0.0
    %435 = vmatpush.msra.mxu0 0.0
    %436 = vmatpush.msra.mxu0 0.0
    %437 = vmatpush.msra.mxu0 0.0
    %438 = vmatpush.msra.mxu0 %v417
    %439 = vmatmul.f32.gmra.mxu0 %v62
    %v440 = vpop.f32.mrf.mxu0
    %v441 = vadd.f32 %v421, %v440
    %442 = vmatmul.f32.gmra.mxu0 %v65
    %v443 = vpop.f32.mrf.mxu0
    %v444 = vadd.f32 %v421, %v443
    %445 = vmatmul.f32.gmra.mxu0 %v68
    %v446 = vpop.f32.mrf.mxu0
    %v447 = vadd.f32 %v421, %v446
    %448 = vmatmul.f32.gmra.mxu0 %v71
    %v449 = vpop.f32.mrf.mxu0
    %v450 = vadd.f32 %v421, %v449
    %451 = vmatmul.f32.gmra.mxu0 %v74
    %v452 = vpop.f32.mrf.mxu0
    %v453 = vadd.f32 %v421, %v452
    %454 = vmatmul.f32.gmra.mxu0 %v77
    %v455 = vpop.f32.mrf.mxu0
    %v456 = vadd.f32 %v421, %v455
    %457 = vmatmul.f32.gmra.mxu0 %v80
    %v458 = vpop.f32.mrf.mxu0
    %v459 = vadd.f32 %v421, %v458
    %460 = vmatmul.f32.gmra.mxu0 %v83
    %v461 = vpop.f32.mrf.mxu0
    %v462 = vadd.f32 %v421, %v461
    %463 = vmatmul.f32.gmra.mxu0 %v86
    %v464 = vpop.f32.mrf.mxu0
    %v465 = vadd.f32 %v421, %v464
    %466 = vmatmul.f32.gmra.mxu0 %v89
    %v467 = vpop.f32.mrf.mxu0
    %v468 = vadd.f32 %v421, %v467
    %469 = vmatmul.f32.gmra.mxu0 %v92
    %v470 = vpop.f32.mrf.mxu0
    %v471 = vadd.f32 %v421, %v470
    %472 = vmatmul.f32.gmra.mxu0 %v95
    %v473 = vpop.f32.mrf.mxu0
    %v474 = vadd.f32 %v421, %v473
    %475 = vmatmul.f32.gmra.mxu0 %v98
    %v476 = vpop.f32.mrf.mxu0
    %v477 = vadd.f32 %v421, %v476
    %478 = vmatmul.f32.gmra.mxu0 %v101
    %v479 = vpop.f32.mrf.mxu0
    %v480 = vadd.f32 %v421, %v479
    %481 = vmatmul.f32.gmra.mxu0 %v104
    %v482 = vpop.f32.mrf.mxu0
    %v483 = vadd.f32 %v421, %v482
    %484 = vmatmul.f32.gmra.mxu0 %v107
    %v485 = vpop.f32.mrf.mxu0
    %v486 = vadd.f32 %v421, %v485
    %487 = vdwg.mxu0
    %s488 = scalar_lea.vmem [#allocation2], 64
    %v489 = vld [vmem:[%s488] sm:$0xff]
    %v490 = vld [vmem:[%s488 + $0x8] sm:$0xff]
    %v491 = vld [vmem:[%s488 + $0x10] sm:$0xff]
    %v492 = vld [vmem:[%s488 + $0x18] sm:$0xff]
    %v493 = vld [vmem:[%s488 + $0x20] sm:$0xff]
    %v494 = vld [vmem:[%s488 + $0x28] sm:$0xff]
    %v495 = vld [vmem:[%s488 + $0x30] sm:$0xff]
    %v496 = vld [vmem:[%s488 + $0x38] sm:$0xff]
    %v498 = vsel %vm270, %v400, 0
    %v501 = vsel %vm270, %v401, 0
    %v504 = vsel %vm270, %v402, 0
    %v507 = vsel %vm270, %v403, 0
    %v510 = vsel %vm270, %v404, 0
    %v513 = vsel %vm270, %v405, 0
    %v516 = vsel %vm270, %v406, 0
    %v519 = vsel %vm270, %v407, 0
    %v522 = vsel %vm270, %v408, 0
    %v525 = vsel %vm270, %v409, 0
    %v528 = vsel %vm270, %v410, 0
    %v531 = vsel %vm270, %v411, 0
    %v534 = vsel %vm270, %v412, 0
    %v537 = vsel %vm270, %v413, 0
    %v540 = vsel %vm270, %v414, 0
    %v543 = vsel %vm270, %v415, 0
    %545 = vmatpush.msra.mxu0 0.0
    %546 = vmatpush.msra.mxu0 0.0
    %547 = vmatpush.msra.mxu0 0.0
    %548 = vmatpush.msra.mxu0 0.0
    %549 = vmatpush.msra.mxu0 0.0
    %550 = vmatpush.msra.mxu0 0.0
    %551 = vmatpush.msra.mxu0 0.0
    %552 = vmatpush.msra.mxu0 0.0
    %553 = vmatpush.msra.mxu0 %v496
    %554 = vmatpush.msra.mxu0 %v495
    %555 = vmatpush.msra.mxu0 %v494
    %556 = vmatpush.msra.mxu0 %v493
    %557 = vmatpush.msra.mxu0 %v492
    %558 = vmatpush.msra.mxu0 %v491
    %559 = vmatpush.msra.mxu0 %v490
    %560 = vmatpush.msra.mxu0 %v489
    %561 = vmatmul.f32.gmra.mxu0 %v498
    %v562 = vpop.f32.mrf.mxu0
    %v563 = vadd.f32 0.0, %v562
    %564 = vmatmul.f32.gmra.mxu0 %v501
    %v565 = vpop.f32.mrf.mxu0
    %v566 = vadd.f32 0.0, %v565
    %567 = vmatmul.f32.gmra.mxu0 %v504
    %v568 = vpop.f32.mrf.mxu0
    %v569 = vadd.f32 0.0, %v568
    %570 = vmatmul.f32.gmra.mxu0 %v507
    %v571 = vpop.f32.mrf.mxu0
    %v572 = vadd.f32 0.0, %v571
    %573 = vmatmul.f32.gmra.mxu0 %v510
    %v574 = vpop.f32.mrf.mxu0
    %v575 = vadd.f32 0.0, %v574
    %576 = vmatmul.f32.gmra.mxu0 %v513
    %v577 = vpop.f32.mrf.mxu0
    %v578 = vadd.f32 0.0, %v577
    %579 = vmatmul.f32.gmra.mxu0 %v516
    %v580 = vpop.f32.mrf.mxu0
    %v581 = vadd.f32 0.0, %v580
    %582 = vmatmul.f32.gmra.mxu0 %v519
    %v583 = vpop.f32.mrf.mxu0
    %v584 = vadd.f32 0.0, %v583
    %585 = vmatmul.f32.gmra.mxu0 %v522
    %v586 = vpop.f32.mrf.mxu0
    %v587 = vadd.f32 0.0, %v586
    %588 = vmatmul.f32.gmra.mxu0 %v525
    %v589 = vpop.f32.mrf.mxu0
    %v590 = vadd.f32 0.0, %v589
    %591 = vmatmul.f32.gmra.mxu0 %v528
    %v592 = vpop.f32.mrf.mxu0
    %v593 = vadd.f32 0.0, %v592
    %594 = vmatmul.f32.gmra.mxu0 %v531
    %v595 = vpop.f32.mrf.mxu0
    %v596 = vadd.f32 0.0, %v595
    %597 = vmatmul.f32.gmra.mxu0 %v534
    %v598 = vpop.f32.mrf.mxu0
    %v599 = vadd.f32 0.0, %v598
    %600 = vmatmul.f32.gmra.mxu0 %v537
    %v601 = vpop.f32.mrf.mxu0
    %v602 = vadd.f32 0.0, %v601
    %603 = vmatmul.f32.gmra.mxu0 %v540
    %v604 = vpop.f32.mrf.mxu0
    %v605 = vadd.f32 0.0, %v604
    %606 = vmatmul.f32.gmra.mxu0 %v543
    %v607 = vpop.f32.mrf.mxu0
    %v608 = vadd.f32 0.0, %v607
    %609 = vdwg.mxu0
    %v610 = vadd.f32 %v441, %v563
    %v611 = vadd.f32 %v444, %v566
    %v612 = vadd.f32 %v447, %v569
    %v613 = vadd.f32 %v450, %v572
    %v614 = vadd.f32 %v453, %v575
    %v615 = vadd.f32 %v456, %v578
    %v616 = vadd.f32 %v459, %v581
    %v617 = vadd.f32 %v462, %v584
    %v618 = vadd.f32 %v465, %v587
    %v619 = vadd.f32 %v468, %v590
    %v620 = vadd.f32 %v471, %v593
    %v621 = vadd.f32 %v474, %v596
    %v622 = vadd.f32 %v477, %v599
    %v623 = vadd.f32 %v480, %v602
    %v624 = vadd.f32 %v483, %v605
    %v625 = vadd.f32 %v486, %v608
    %v626 = vtanh.pop %v610
    %v627 = vtanh.pop %v611
    %v628 = vtanh.pop %v612
    %v629 = vtanh.pop %v613
    %v630 = vtanh.pop %v614
    %v631 = vtanh.pop %v615
    %v632 = vtanh.pop %v616
    %v633 = vtanh.pop %v617
    %v634 = vtanh.pop %v618
    %v635 = vtanh.pop %v619
    %v636 = vtanh.pop %v620
    %v637 = vtanh.pop %v621
    %v638 = vtanh.pop %v622
    %v639 = vtanh.pop %v623
    %v640 = vtanh.pop %v624
    %v641 = vtanh.pop %v625
    %s642 = scalar_lea.vmem %s1, 24
    %v643 = vld [vmem:[%s642] sm:$0xff]
    %s644 = scalar_lea.vmem %s2, 3
    %v645 = vld [vmem:[%s644] sm:$0x1]
    %v647 = vperm.slane %v645, 0
    %649 = vmatpush.msra.mxu0 0.0
    %650 = vmatpush.msra.mxu0 0.0
    %651 = vmatpush.msra.mxu0 0.0
    %652 = vmatpush.msra.mxu0 0.0
    %653 = vmatpush.msra.mxu0 0.0
    %654 = vmatpush.msra.mxu0 0.0
    %655 = vmatpush.msra.mxu0 0.0
    %656 = vmatpush.msra.mxu0 0.0
    %657 = vmatpush.msra.mxu0 0.0
    %658 = vmatpush.msra.mxu0 0.0
    %659 = vmatpush.msra.mxu0 0.0
    %660 = vmatpush.msra.mxu0 0.0
    %661 = vmatpush.msra.mxu0 0.0
    %662 = vmatpush.msra.mxu0 0.0
    %663 = vmatpush.msra.mxu0 0.0
    %664 = vmatpush.msra.mxu0 %v643
    %665 = vmatmul.f32.gmra.mxu0 %v62
    %v666 = vpop.f32.mrf.mxu0
    %v667 = vadd.f32 %v647, %v666
    %668 = vmatmul.f32.gmra.mxu0 %v65
    %v669 = vpop.f32.mrf.mxu0
    %v670 = vadd.f32 %v647, %v669
    %671 = vmatmul.f32.gmra.mxu0 %v68
    %v672 = vpop.f32.mrf.mxu0
    %v673 = vadd.f32 %v647, %v672
    %674 = vmatmul.f32.gmra.mxu0 %v71
    %v675 = vpop.f32.mrf.mxu0
    %v676 = vadd.f32 %v647, %v675
    %677 = vmatmul.f32.gmra.mxu0 %v74
    %v678 = vpop.f32.mrf.mxu0
    %v679 = vadd.f32 %v647, %v678
    %680 = vmatmul.f32.gmra.mxu0 %v77
    %v681 = vpop.f32.mrf.mxu0
    %v682 = vadd.f32 %v647, %v681
    %683 = vmatmul.f32.gmra.mxu0 %v80
    %v684 = vpop.f32.mrf.mxu0
    %v685 = vadd.f32 %v647, %v684
    %686 = vmatmul.f32.gmra.mxu0 %v83
    %v687 = vpop.f32.mrf.mxu0
    %v688 = vadd.f32 %v647, %v687
    %689 = vmatmul.f32.gmra.mxu0 %v86
    %v690 = vpop.f32.mrf.mxu0
    %v691 = vadd.f32 %v647, %v690
    %692 = vmatmul.f32.gmra.mxu0 %v89
    %v693 = vpop.f32.mrf.mxu0
    %v694 = vadd.f32 %v647, %v693
    %695 = vmatmul.f32.gmra.mxu0 %v92
    %v696 = vpop.f32.mrf.mxu0
    %v697 = vadd.f32 %v647, %v696
    %698 = vmatmul.f32.gmra.mxu0 %v95
    %v699 = vpop.f32.mrf.mxu0
    %v700 = vadd.f32 %v647, %v699
    %701 = vmatmul.f32.gmra.mxu0 %v98
    %v702 = vpop.f32.mrf.mxu0
    %v703 = vadd.f32 %v647, %v702
    %704 = vmatmul.f32.gmra.mxu0 %v101
    %v705 = vpop.f32.mrf.mxu0
    %v706 = vadd.f32 %v647, %v705
    %707 = vmatmul.f32.gmra.mxu0 %v104
    %v708 = vpop.f32.mrf.mxu0
    %v709 = vadd.f32 %v647, %v708
    %710 = vmatmul.f32.gmra.mxu0 %v107
    %v711 = vpop.f32.mrf.mxu0
    %v712 = vadd.f32 %v647, %v711
    %713 = vdwg.mxu0
    %s714 = scalar_lea.vmem [#allocation2], 128
    %v715 = vld [vmem:[%s714] sm:$0xff]
    %v716 = vld [vmem:[%s714 + $0x8] sm:$0xff]
    %v717 = vld [vmem:[%s714 + $0x10] sm:$0xff]
    %v718 = vld [vmem:[%s714 + $0x18] sm:$0xff]
    %v719 = vld [vmem:[%s714 + $0x20] sm:$0xff]
    %v720 = vld [vmem:[%s714 + $0x28] sm:$0xff]
    %v721 = vld [vmem:[%s714 + $0x30] sm:$0xff]
    %v722 = vld [vmem:[%s714 + $0x38] sm:$0xff]
    %v724 = vsel %vm270, %v626, 0
    %v727 = vsel %vm270, %v627, 0
    %v730 = vsel %vm270, %v628, 0
    %v733 = vsel %vm270, %v629, 0
    %v736 = vsel %vm270, %v630, 0
    %v739 = vsel %vm270, %v631, 0
    %v742 = vsel %vm270, %v632, 0
    %v745 = vsel %vm270, %v633, 0
    %v748 = vsel %vm270, %v634, 0
    %v751 = vsel %vm270, %v635, 0
    %v754 = vsel %vm270, %v636, 0
    %v757 = vsel %vm270, %v637, 0
    %v760 = vsel %vm270, %v638, 0
    %v763 = vsel %vm270, %v639, 0
    %v766 = vsel %vm270, %v640, 0
    %v769 = vsel %vm270, %v641, 0
    %771 = vmatpush.msra.mxu0 0.0
    %772 = vmatpush.msra.mxu0 0.0
    %773 = vmatpush.msra.mxu0 0.0
    %774 = vmatpush.msra.mxu0 0.0
    %775 = vmatpush.msra.mxu0 0.0
    %776 = vmatpush.msra.mxu0 0.0
    %777 = vmatpush.msra.mxu0 0.0
    %778 = vmatpush.msra.mxu0 0.0
    %779 = vmatpush.msra.mxu0 %v722
    %780 = vmatpush.msra.mxu0 %v721
    %781 = vmatpush.msra.mxu0 %v720
    %782 = vmatpush.msra.mxu0 %v719
    %783 = vmatpush.msra.mxu0 %v718
    %784 = vmatpush.msra.mxu0 %v717
    %785 = vmatpush.msra.mxu0 %v716
    %786 = vmatpush.msra.mxu0 %v715
    %787 = vmatmul.f32.gmra.mxu0 %v724
    %v788 = vpop.f32.mrf.mxu0
    %v789 = vadd.f32 0.0, %v788
    %790 = vmatmul.f32.gmra.mxu0 %v727
    %v791 = vpop.f32.mrf.mxu0
    %v792 = vadd.f32 0.0, %v791
    %793 = vmatmul.f32.gmra.mxu0 %v730
    %v794 = vpop.f32.mrf.mxu0
    %v795 = vadd.f32 0.0, %v794
    %796 = vmatmul.f32.gmra.mxu0 %v733
    %v797 = vpop.f32.mrf.mxu0
    %v798 = vadd.f32 0.0, %v797
    %799 = vmatmul.f32.gmra.mxu0 %v736
    %v800 = vpop.f32.mrf.mxu0
    %v801 = vadd.f32 0.0, %v800
    %802 = vmatmul.f32.gmra.mxu0 %v739
    %v803 = vpop.f32.mrf.mxu0
    %v804 = vadd.f32 0.0, %v803
    %805 = vmatmul.f32.gmra.mxu0 %v742
    %v806 = vpop.f32.mrf.mxu0
    %v807 = vadd.f32 0.0, %v806
    %808 = vmatmul.f32.gmra.mxu0 %v745
    %v809 = vpop.f32.mrf.mxu0
    %v810 = vadd.f32 0.0, %v809
    %811 = vmatmul.f32.gmra.mxu0 %v748
    %v812 = vpop.f32.mrf.mxu0
    %v813 = vadd.f32 0.0, %v812
    %814 = vmatmul.f32.gmra.mxu0 %v751
    %v815 = vpop.f32.mrf.mxu0
    %v816 = vadd.f32 0.0, %v815
    %817 = vmatmul.f32.gmra.mxu0 %v754
    %v818 = vpop.f32.mrf.mxu0
    %v819 = vadd.f32 0.0, %v818
    %820 = vmatmul.f32.gmra.mxu0 %v757
    %v821 = vpop.f32.mrf.mxu0
    %v822 = vadd.f32 0.0, %v821
    %823 = vmatmul.f32.gmra.mxu0 %v760
    %v824 = vpop.f32.mrf.mxu0
    %v825 = vadd.f32 0.0, %v824
    %826 = vmatmul.f32.gmra.mxu0 %v763
    %v827 = vpop.f32.mrf.mxu0
    %v828 = vadd.f32 0.0, %v827
    %829 = vmatmul.f32.gmra.mxu0 %v766
    %v830 = vpop.f32.mrf.mxu0
    %v831 = vadd.f32 0.0, %v830
    %832 = vmatmul.f32.gmra.mxu0 %v769
    %v833 = vpop.f32.mrf.mxu0
    %v834 = vadd.f32 0.0, %v833
    %835 = vdwg.mxu0
    %v836 = vadd.f32 %v667, %v789
    %v837 = vadd.f32 %v670, %v792
    %v838 = vadd.f32 %v673, %v795
    %v839 = vadd.f32 %v676, %v798
    %v840 = vadd.f32 %v679, %v801
    %v841 = vadd.f32 %v682, %v804
    %v842 = vadd.f32 %v685, %v807
    %v843 = vadd.f32 %v688, %v810
    %v844 = vadd.f32 %v691, %v813
    %v845 = vadd.f32 %v694, %v816
    %v846 = vadd.f32 %v697, %v819
    %v847 = vadd.f32 %v700, %v822
    %v848 = vadd.f32 %v703, %v825
    %v849 = vadd.f32 %v706, %v828
    %v850 = vadd.f32 %v709, %v831
    %v851 = vadd.f32 %v712, %v834
    %v852 = vtanh.pop %v836
    %v853 = vtanh.pop %v837
    %v854 = vtanh.pop %v838
    %v855 = vtanh.pop %v839
    %v856 = vtanh.pop %v840
    %v857 = vtanh.pop %v841
    %v858 = vtanh.pop %v842
    %v859 = vtanh.pop %v843
    %v860 = vtanh.pop %v844
    %v861 = vtanh.pop %v845
    %v862 = vtanh.pop %v846
    %v863 = vtanh.pop %v847
    %v864 = vtanh.pop %v848
    %v865 = vtanh.pop %v849
    %v866 = vtanh.pop %v850
    %v867 = vtanh.pop %v851
    %s868 = scalar_lea.vmem %s1, 32
    %v869 = vld [vmem:[%s868] sm:$0xff]
    %s870 = scalar_lea.vmem %s2, 4
    %v871 = vld [vmem:[%s870] sm:$0x1]
    %v873 = vperm.slane %v871, 0
    %875 = vmatpush.msra.mxu0 0.0
    %876 = vmatpush.msra.mxu0 0.0
    %877 = vmatpush.msra.mxu0 0.0
    %878 = vmatpush.msra.mxu0 0.0
    %879 = vmatpush.msra.mxu0 0.0
    %880 = vmatpush.msra.mxu0 0.0
    %881 = vmatpush.msra.mxu0 0.0
    %882 = vmatpush.msra.mxu0 0.0
    %883 = vmatpush.msra.mxu0 0.0
    %884 = vmatpush.msra.mxu0 0.0
    %885 = vmatpush.msra.mxu0 0.0
    %886 = vmatpush.msra.mxu0 0.0
    %887 = vmatpush.msra.mxu0 0.0
    %888 = vmatpush.msra.mxu0 0.0
    %889 = vmatpush.msra.mxu0 0.0
    %890 = vmatpush.msra.mxu0 %v869
    %891 = vmatmul.f32.gmra.mxu0 %v62
    %v892 = vpop.f32.mrf.mxu0
    %v893 = vadd.f32 %v873, %v892
    %894 = vmatmul.f32.gmra.mxu0 %v65
    %v895 = vpop.f32.mrf.mxu0
    %v896 = vadd.f32 %v873, %v895
    %897 = vmatmul.f32.gmra.mxu0 %v68
    %v898 = vpop.f32.mrf.mxu0
    %v899 = vadd.f32 %v873, %v898
    %900 = vmatmul.f32.gmra.mxu0 %v71
    %v901 = vpop.f32.mrf.mxu0
    %v902 = vadd.f32 %v873, %v901
    %903 = vmatmul.f32.gmra.mxu0 %v74
    %v904 = vpop.f32.mrf.mxu0
    %v905 = vadd.f32 %v873, %v904
    %906 = vmatmul.f32.gmra.mxu0 %v77
    %v907 = vpop.f32.mrf.mxu0
    %v908 = vadd.f32 %v873, %v907
    %909 = vmatmul.f32.gmra.mxu0 %v80
    %v910 = vpop.f32.mrf.mxu0
    %v911 = vadd.f32 %v873, %v910
    %912 = vmatmul.f32.gmra.mxu0 %v83
    %v913 = vpop.f32.mrf.mxu0
    %v914 = vadd.f32 %v873, %v913
    %915 = vmatmul.f32.gmra.mxu0 %v86
    %v916 = vpop.f32.mrf.mxu0
    %v917 = vadd.f32 %v873, %v916
    %918 = vmatmul.f32.gmra.mxu0 %v89
    %v919 = vpop.f32.mrf.mxu0
    %v920 = vadd.f32 %v873, %v919
    %921 = vmatmul.f32.gmra.mxu0 %v92
    %v922 = vpop.f32.mrf.mxu0
    %v923 = vadd.f32 %v873, %v922
    %924 = vmatmul.f32.gmra.mxu0 %v95
    %v925 = vpop.f32.mrf.mxu0
    %v926 = vadd.f32 %v873, %v925
    %927 = vmatmul.f32.gmra.mxu0 %v98
    %v928 = vpop.f32.mrf.mxu0
    %v929 = vadd.f32 %v873, %v928
    %930 = vmatmul.f32.gmra.mxu0 %v101
    %v931 = vpop.f32.mrf.mxu0
    %v932 = vadd.f32 %v873, %v931
    %933 = vmatmul.f32.gmra.mxu0 %v104
    %v934 = vpop.f32.mrf.mxu0
    %v935 = vadd.f32 %v873, %v934
    %936 = vmatmul.f32.gmra.mxu0 %v107
    %v937 = vpop.f32.mrf.mxu0
    %v938 = vadd.f32 %v873, %v937
    %939 = vdwg.mxu0
    %s940 = scalar_lea.vmem [#allocation2], 192
    %v941 = vld [vmem:[%s940] sm:$0xff]
    %v942 = vld [vmem:[%s940 + $0x8] sm:$0xff]
    %v943 = vld [vmem:[%s940 + $0x10] sm:$0xff]
    %v944 = vld [vmem:[%s940 + $0x18] sm:$0xff]
    %v945 = vld [vmem:[%s940 + $0x20] sm:$0xff]
    %v946 = vld [vmem:[%s940 + $0x28] sm:$0xff]
    %v947 = vld [vmem:[%s940 + $0x30] sm:$0xff]
    %v948 = vld [vmem:[%s940 + $0x38] sm:$0xff]
    %v950 = vsel %vm270, %v852, 0
    %v953 = vsel %vm270, %v853, 0
    %v956 = vsel %vm270, %v854, 0
    %v959 = vsel %vm270, %v855, 0
    %v962 = vsel %vm270, %v856, 0
    %v965 = vsel %vm270, %v857, 0
    %v968 = vsel %vm270, %v858, 0
    %v971 = vsel %vm270, %v859, 0
    %v974 = vsel %vm270, %v860, 0
    %v977 = vsel %vm270, %v861, 0
    %v980 = vsel %vm270, %v862, 0
    %v983 = vsel %vm270, %v863, 0
    %v986 = vsel %vm270, %v864, 0
    %v989 = vsel %vm270, %v865, 0
    %v992 = vsel %vm270, %v866, 0
    %v995 = vsel %vm270, %v867, 0
    %997 = vmatpush.msra.mxu0 0.0
    %998 = vmatpush.msra.mxu0 0.0
    %999 = vmatpush.msra.mxu0 0.0
    %1000 = vmatpush.msra.mxu0 0.0
    %1001 = vmatpush.msra.mxu0 0.0
    %1002 = vmatpush.msra.mxu0 0.0
    %1003 = vmatpush.msra.mxu0 0.0
    %1004 = vmatpush.msra.mxu0 0.0
    %1005 = vmatpush.msra.mxu0 %v948
    %1006 = vmatpush.msra.mxu0 %v947
    %1007 = vmatpush.msra.mxu0 %v946
    %1008 = vmatpush.msra.mxu0 %v945
    %1009 = vmatpush.msra.mxu0 %v944
    %1010 = vmatpush.msra.mxu0 %v943
    %1011 = vmatpush.msra.mxu0 %v942
    %1012 = vmatpush.msra.mxu0 %v941
    %1013 = vmatmul.f32.gmra.mxu0 %v950
    %v1014 = vpop.f32.mrf.mxu0
    %v1015 = vadd.f32 0.0, %v1014
    %1016 = vmatmul.f32.gmra.mxu0 %v953
    %v1017 = vpop.f32.mrf.mxu0
    %v1018 = vadd.f32 0.0, %v1017
    %1019 = vmatmul.f32.gmra.mxu0 %v956
    %v1020 = vpop.f32.mrf.mxu0
    %v1021 = vadd.f32 0.0, %v1020
    %1022 = vmatmul.f32.gmra.mxu0 %v959
    %v1023 = vpop.f32.mrf.mxu0
    %v1024 = vadd.f32 0.0, %v1023
    %1025 = vmatmul.f32.gmra.mxu0 %v962
    %v1026 = vpop.f32.mrf.mxu0
    %v1027 = vadd.f32 0.0, %v1026
    %1028 = vmatmul.f32.gmra.mxu0 %v965
    %v1029 = vpop.f32.mrf.mxu0
    %v1030 = vadd.f32 0.0, %v1029
    %1031 = vmatmul.f32.gmra.mxu0 %v968
    %v1032 = vpop.f32.mrf.mxu0
    %v1033 = vadd.f32 0.0, %v1032
    %1034 = vmatmul.f32.gmra.mxu0 %v971
    %v1035 = vpop.f32.mrf.mxu0
    %v1036 = vadd.f32 0.0, %v1035
    %1037 = vmatmul.f32.gmra.mxu0 %v974
    %v1038 = vpop.f32.mrf.mxu0
    %v1039 = vadd.f32 0.0, %v1038
    %1040 = vmatmul.f32.gmra.mxu0 %v977
    %v1041 = vpop.f32.mrf.mxu0
    %v1042 = vadd.f32 0.0, %v1041
    %1043 = vmatmul.f32.gmra.mxu0 %v980
    %v1044 = vpop.f32.mrf.mxu0
    %v1045 = vadd.f32 0.0, %v1044
    %1046 = vmatmul.f32.gmra.mxu0 %v983
    %v1047 = vpop.f32.mrf.mxu0
    %v1048 = vadd.f32 0.0, %v1047
    %1049 = vmatmul.f32.gmra.mxu0 %v986
    %v1050 = vpop.f32.mrf.mxu0
    %v1051 = vadd.f32 0.0, %v1050
    %1052 = vmatmul.f32.gmra.mxu0 %v989
    %v1053 = vpop.f32.mrf.mxu0
    %v1054 = vadd.f32 0.0, %v1053
    %1055 = vmatmul.f32.gmra.mxu0 %v992
    %v1056 = vpop.f32.mrf.mxu0
    %v1057 = vadd.f32 0.0, %v1056
    %1058 = vmatmul.f32.gmra.mxu0 %v995
    %v1059 = vpop.f32.mrf.mxu0
    %v1060 = vadd.f32 0.0, %v1059
    %1061 = vdwg.mxu0
    %v1062 = vadd.f32 %v893, %v1015
    %v1063 = vadd.f32 %v896, %v1018
    %v1064 = vadd.f32 %v899, %v1021
    %v1065 = vadd.f32 %v902, %v1024
    %v1066 = vadd.f32 %v905, %v1027
    %v1067 = vadd.f32 %v908, %v1030
    %v1068 = vadd.f32 %v911, %v1033
    %v1069 = vadd.f32 %v914, %v1036
    %v1070 = vadd.f32 %v917, %v1039
    %v1071 = vadd.f32 %v920, %v1042
    %v1072 = vadd.f32 %v923, %v1045
    %v1073 = vadd.f32 %v926, %v1048
    %v1074 = vadd.f32 %v929, %v1051
    %v1075 = vadd.f32 %v932, %v1054
    %v1076 = vadd.f32 %v935, %v1057
    %v1077 = vadd.f32 %v938, %v1060
    %v1078 = vtanh.pop %v1062
    %v1079 = vtanh.pop %v1063
    %v1080 = vtanh.pop %v1064
    %v1081 = vtanh.pop %v1065
    %v1082 = vtanh.pop %v1066
    %v1083 = vtanh.pop %v1067
    %v1084 = vtanh.pop %v1068
    %v1085 = vtanh.pop %v1069
    %v1086 = vtanh.pop %v1070
    %v1087 = vtanh.pop %v1071
    %v1088 = vtanh.pop %v1072
    %v1089 = vtanh.pop %v1073
    %v1090 = vtanh.pop %v1074
    %v1091 = vtanh.pop %v1075
    %v1092 = vtanh.pop %v1076
    %v1093 = vtanh.pop %v1077
    %v1094 = vld [vmem:[%s4] sm:$0xff]
    %v1095 = vld [vmem:[%s4 + $0x8] sm:$0xff]
    %v1096 = vld [vmem:[%s4 + $0x10] sm:$0xff]
    %v1097 = vld [vmem:[%s4 + $0x18] sm:$0xff]
    %v1098 = vld [vmem:[%s4 + $0x20] sm:$0xff]
    %v1099 = vld [vmem:[%s4 + $0x28] sm:$0xff]
    %v1100 = vld [vmem:[%s4 + $0x30] sm:$0xff]
    %v1101 = vld [vmem:[%s4 + $0x38] sm:$0xff]
    %v1102 = vld [vmem:[%s5] sm:$0x1]
    %v1104 = vperm.slane %v1102, 0
    %v1107 = vsel %vm270, %v1078, 0
    %v1110 = vsel %vm270, %v1079, 0
    %v1113 = vsel %vm270, %v1080, 0
    %v1116 = vsel %vm270, %v1081, 0
    %v1119 = vsel %vm270, %v1082, 0
    %v1122 = vsel %vm270, %v1083, 0
    %v1125 = vsel %vm270, %v1084, 0
    %v1128 = vsel %vm270, %v1085, 0
    %v1131 = vsel %vm270, %v1086, 0
    %v1134 = vsel %vm270, %v1087, 0
    %v1137 = vsel %vm270, %v1088, 0
    %v1140 = vsel %vm270, %v1089, 0
    %v1143 = vsel %vm270, %v1090, 0
    %v1146 = vsel %vm270, %v1091, 0
    %v1149 = vsel %vm270, %v1092, 0
    %v1152 = vsel %vm270, %v1093, 0
    %1154 = vmatpush.msra.mxu0 0.0
    %1155 = vmatpush.msra.mxu0 0.0
    %1156 = vmatpush.msra.mxu0 0.0
    %1157 = vmatpush.msra.mxu0 0.0
    %1158 = vmatpush.msra.mxu0 0.0
    %1159 = vmatpush.msra.mxu0 0.0
    %1160 = vmatpush.msra.mxu0 0.0
    %1161 = vmatpush.msra.mxu0 0.0
    %1162 = vmatpush.msra.mxu0 %v1101
    %1163 = vmatpush.msra.mxu0 %v1100
    %1164 = vmatpush.msra.mxu0 %v1099
    %1165 = vmatpush.msra.mxu0 %v1098
    %1166 = vmatpush.msra.mxu0 %v1097
    %1167 = vmatpush.msra.mxu0 %v1096
    %1168 = vmatpush.msra.mxu0 %v1095
    %1169 = vmatpush.msra.mxu0 %v1094
    %1170 = vmatmul.f32.gmra.mxu0 %v1107
    %v1171 = vpop.f32.mrf.mxu0
    %v1172 = vadd.f32 %v1104, %v1171
    %1173 = vmatmul.f32.gmra.mxu0 %v1110
    %v1174 = vpop.f32.mrf.mxu0
    %v1175 = vadd.f32 %v1104, %v1174
    %1176 = vmatmul.f32.gmra.mxu0 %v1113
    %v1177 = vpop.f32.mrf.mxu0
    %v1178 = vadd.f32 %v1104, %v1177
    %1179 = vmatmul.f32.gmra.mxu0 %v1116
    %v1180 = vpop.f32.mrf.mxu0
    %v1181 = vadd.f32 %v1104, %v1180
    %1182 = vmatmul.f32.gmra.mxu0 %v1119
    %v1183 = vpop.f32.mrf.mxu0
    %v1184 = vadd.f32 %v1104, %v1183
    %1185 = vmatmul.f32.gmra.mxu0 %v1122
    %v1186 = vpop.f32.mrf.mxu0
    %v1187 = vadd.f32 %v1104, %v1186
    %1188 = vmatmul.f32.gmra.mxu0 %v1125
    %v1189 = vpop.f32.mrf.mxu0
    %v1190 = vadd.f32 %v1104, %v1189
    %1191 = vmatmul.f32.gmra.mxu0 %v1128
    %v1192 = vpop.f32.mrf.mxu0
    %v1193 = vadd.f32 %v1104, %v1192
    %1194 = vmatmul.f32.gmra.mxu0 %v1131
    %v1195 = vpop.f32.mrf.mxu0
    %v1196 = vadd.f32 %v1104, %v1195
    %1197 = vmatmul.f32.gmra.mxu0 %v1134
    %v1198 = vpop.f32.mrf.mxu0
    %v1199 = vadd.f32 %v1104, %v1198
    %1200 = vmatmul.f32.gmra.mxu0 %v1137
    %v1201 = vpop.f32.mrf.mxu0
    %v1202 = vadd.f32 %v1104, %v1201
    %1203 = vmatmul.f32.gmra.mxu0 %v1140
    %v1204 = vpop.f32.mrf.mxu0
    %v1205 = vadd.f32 %v1104, %v1204
    %1206 = vmatmul.f32.gmra.mxu0 %v1143
    %v1207 = vpop.f32.mrf.mxu0
    %v1208 = vadd.f32 %v1104, %v1207
    %1209 = vmatmul.f32.gmra.mxu0 %v1146
    %v1210 = vpop.f32.mrf.mxu0
    %v1211 = vadd.f32 %v1104, %v1210
    %1212 = vmatmul.f32.gmra.mxu0 %v1149
    %v1213 = vpop.f32.mrf.mxu0
    %v1214 = vadd.f32 %v1104, %v1213
    %1215 = vmatmul.f32.gmra.mxu0 %v1152
    %v1216 = vpop.f32.mrf.mxu0
    %v1217 = vadd.f32 %v1104, %v1216
    %1218 = vdwg.mxu0
    %1219 = vst [vmem:[%s6] sm:$0xff] %v1172
    %1220 = vst [vmem:[%s6 + $0x8] sm:$0xff] %v1175
    %1221 = vst [vmem:[%s6 + $0x10] sm:$0xff] %v1178
    %1222 = vst [vmem:[%s6 + $0x18] sm:$0xff] %v1181
    %1223 = vst [vmem:[%s6 + $0x20] sm:$0xff] %v1184
    %1224 = vst [vmem:[%s6 + $0x28] sm:$0xff] %v1187
    %1225 = vst [vmem:[%s6 + $0x30] sm:$0xff] %v1190
    %1226 = vst [vmem:[%s6 + $0x38] sm:$0xff] %v1193
    %1227 = vst [vmem:[%s6 + $0x40] sm:$0xff] %v1196
    %1228 = vst [vmem:[%s6 + $0x48] sm:$0xff] %v1199
    %1229 = vst [vmem:[%s6 + $0x50] sm:$0xff] %v1202
    %1230 = vst [vmem:[%s6 + $0x58] sm:$0xff] %v1205
    %1231 = vst [vmem:[%s6 + $0x60] sm:$0xff] %v1208
    %1232 = vst [vmem:[%s6 + $0x68] sm:$0xff] %v1211
    %1233 = vst [vmem:[%s6 + $0x70] sm:$0xff] %v1214
    %1234 = vst [vmem:[%s6 + $0x78] sm:$0xff] %v1217
    // Predicated region
    $region30: #{block_rnn_forward.1} parent=1 // pred_check
      _
    $region31: #{block_rnn_forward.1} parent=1 // pred_check_branch
      %1236 = sbr.rel (0) target = $region33
    $region32: #{block_rnn_forward.1} parent=1 // pred_region
      _
    $region33: #{block_rnn_forward.1} parent=1 // pred_fallthru
      _
    // Predicated region
    $region34: #{block_rnn_forward.1} parent=1 // pred_check
      _
    $region35: #{block_rnn_forward.1} parent=1 // pred_check_branch
      %1238 = sbr.rel (0) target = $region37
    $region36: #{block_rnn_forward.1} parent=1 // pred_region
      _
    $region37: #{block_rnn_forward.1} parent=1 // pred_fallthru
      _
    %1239 = vsyncpa [#allocation3], 1

</llo_original>
